<compile_context>
chip_gen: v5e
topology: v5e:2x2
jax: 0.10.0
libtpu: 0.0.40
codegen_flags: <defaults>
</compile_context>

<pallas_src>
import math

import jax
import jax.numpy as jnp
from jax.experimental import pallas as pl

# ------------------------- small, self-consistent config -------------------------
B, T, N_VARS = 2, 32, 4          # batch, seq_len, n_vars
SEQ_LEN = T
PRED_LEN = 16                    # test_pred_len
D_MODEL = 32
N_HEADS = 4
D_FF = 32                        # also d_keys of ReprogrammingLayer
D_LLM = 768                      # GPT2 branch of the module
PATCH_LEN = 8                    # input_token_len
STRIDE = 8
PATCH_NUMS = (SEQ_LEN - PATCH_LEN) // STRIDE + 2     # = 5
HEAD_NF = D_FF * PATCH_NUMS                          # = 160
NUM_TOKENS = 64                  # ts_vocab_size (S)
VOCAB_SIZE = 128                 # synthetic LLM vocab (word_embeddings rows)
D_KEYS = D_FF                    # = 32 per-head dim
HE = D_KEYS * N_HEADS            # = 128
HS = N_HEADS * NUM_TOKENS        # = 256 (block-diagonal score width)
PAD_LEN = SEQ_LEN + STRIDE       # = 40 (replication-padded length)
BN = B * N_VARS                  # = 8 rows processed in one shot (no grid)


# ------------------------------- the fused kernel ----------------------------------
def _timellm_kernel(
    x_ref,     # (BN, PAD_LEN)  f32  raw series, replication-padded (NOT normalized)
    wq_ref,    # (PAD_LEN, P*HE=640) f32  conv-fold + query proj + 1/sqrt(dk) scale
    bq_ref,    # (1, P*HE)      f32  query bias (scaled, tiled per patch)
    kbd_ref,   # (HE, H*S=256)  f32  block-diag precomputed keys  K[s,h*dk+e] -> [h*dk+e, h*S+s]
    vbd_ref,   # (H*S, HE)      f32  block-diag precomputed values
    seg_ref,   # (H*S, HE)      f32  block-ones: per-head segment-sum / broadcast matrix
    who_ref,   # (P, HE, PRED)  f32  out-projection folded into FlattenHead weight
    bh_ref,    # (1, PRED)      f32  folded bias
    o_ref,     # (BN, PRED)     f32
):
    f32 = jnp.float32

    # ---- instance norm (biased var, eps=1e-5) on the unpadded part ----
    x = x_ref[...]                                   # (BN, PAD_LEN)
    xt = x[:, :SEQ_LEN]
    mean = jnp.mean(xt, axis=1, keepdims=True)
    var = jnp.mean((xt - mean) ** 2, axis=1, keepdims=True)
    std = jnp.sqrt(var + 1e-5)
    # normalizing the replication-padded column == replication-padding the normalized series
    xn = (x - mean) / std                            # (BN, PAD_LEN)

    # ---- one fused PatchEmbedding-conv + query projection for ALL (patch, head) ----
    # (BN,40) @ (40,640) -> (BN, 640), columns ordered (patch, head, e), scale folded in.
    q_all = jnp.dot(xn, wq_ref[...], preferred_element_type=f32) + bq_ref[...]

    # stack patches along sublanes: (P*BN, HE) = (40, 128); 128-lane aligned slices.
    q_st = jnp.concatenate(
        [q_all[:, p * HE:(p + 1) * HE] for p in range(PATCH_NUMS)], axis=0)

    # ---- all heads at once via block-diagonal precomputed K / V ----
    s = jnp.dot(q_st, kbd_ref[...], preferred_element_type=f32)     # (40, 256) lanes=(h,s)
    # Per-head softmax over each 64-lane segment. Subtracting the per-row GLOBAL max
    # is exactly equivalent per segment (shift invariance) and keeps exp bounded.
    s = s - jnp.max(s, axis=-1, keepdims=True)
    e = jnp.exp(s)
    # Unnormalized attention output and per-head denominators (block-ones matmul
    # broadcasts each segment sum across that head's 32 output lanes).
    attn_un = jnp.dot(e, vbd_ref[...], preferred_element_type=f32)  # (40, 128) lanes=(h,e)
    denom = jnp.dot(e, seg_ref[...], preferred_element_type=f32)    # (40, 128)
    attn = attn_un * pl.reciprocal(denom, approx=True)              # == softmax(A) @ V

    # ---- out-projection (identity-LLM, d_ff slice) folded into FlattenHead ----
    out = bh_ref[...]                                # (1, PRED), broadcasts below
    for p in range(PATCH_NUMS):
        out = out + jnp.dot(attn[p * BN:(p + 1) * BN, :], who_ref[p],
                            preferred_element_type=f32)             # (BN, PRED)

    # ---- de-normalization ----
    o_ref[...] = out * std + mean


# ------------------------------- parameters ---------------------------------------
def init_params(key):
    ks = jax.random.split(key, 16)

    def nrm(k, shape, scale=0.05):
        return (scale * jax.random.normal(k, shape)).astype(jnp.float32)

    p = {}
    # PatchEmbedding.TokenEmbedding: Conv1d(patch_len -> d_model, k=3, circular, bias=False)
    p["conv_w"] = nrm(ks[0], (D_MODEL, PATCH_LEN, 3))
    # frozen LLM word embeddings (synthetic, deterministic)
    p["word_emb"] = nrm(ks[1], (VOCAB_SIZE, D_LLM))
    # mapping_layer: Linear(vocab_size, num_tokens)
    p["map_w"] = nrm(ks[2], (NUM_TOKENS, VOCAB_SIZE))
    p["map_b"] = nrm(ks[3], (NUM_TOKENS,))
    # ReprogrammingLayer projections
    p["wq"] = nrm(ks[4], (HE, D_MODEL)); p["bq"] = nrm(ks[5], (HE,))
    p["wk"] = nrm(ks[6], (HE, D_LLM));   p["bk"] = nrm(ks[7], (HE,))
    p["wv"] = nrm(ks[8], (HE, D_LLM));   p["bv"] = nrm(ks[9], (HE,))
    p["wo"] = nrm(ks[10], (D_LLM, HE));  p["bo"] = nrm(ks[11], (D_LLM,))
    # FlattenHead: Linear(head_nf, pred_len)
    p["wh"] = nrm(ks[12], (PRED_LEN, HEAD_NF)); p["bh"] = nrm(ks[13], (PRED_LEN,))
    return p


def pack_kernel_params(p):
    """One-time offline folds: everything that does not depend on x_enc."""
    f32 = jnp.float32
    scale = 1.0 / math.sqrt(D_KEYS)

    # ---- fold the circular, bias-free Conv1d + softmax scale into the query weight ----
    # enc[bn,p,d] = sum_{c,k} conv_w[d,c,k] * x_pad[bn, ((p+k-1)%P)*patch_len + c]
    # q = enc @ wq.T + bq  ->  q[:,p,:] = x_pad @ wq_big[p] + bq
    fold = jnp.einsum("hd,dck->hck", p["wq"].astype(f32), p["conv_w"].astype(f32))  # (HE, C, 3)
    wq_big = jnp.zeros((PATCH_NUMS, PAD_LEN, HE), f32)
    for out_p in range(PATCH_NUMS):
        for k in range(3):
            src = (out_p + k - 1) % PATCH_NUMS
            wq_big = wq_big.at[out_p, src * PATCH_LEN:(src + 1) * PATCH_LEN, :].add(fold[:, :, k].T)
    wq_big = wq_big * scale
    # one big query weight, columns ordered (patch, head, e): (PAD_LEN, P*HE)
    wq_all = jnp.transpose(wq_big, (1, 0, 2)).reshape(PAD_LEN, PATCH_NUMS * HE)
    bq_all = jnp.tile((p["bq"] * scale).reshape(1, HE), (1, PATCH_NUMS))            # (1, P*HE)

    # ---- precompute input-independent source / K / V (mapping layer + k/v projections) ----
    source = p["map_w"].astype(f32) @ p["word_emb"].astype(f32) + p["map_b"].reshape(-1, 1)  # (S, D_LLM)
    K = source @ p["wk"].astype(f32).T + p["bk"]     # (S, HE)  columns = (h, e)
    V = source @ p["wv"].astype(f32).T + p["bv"]     # (S, HE)

    # block-diagonal layouts so ONE matmul covers all heads at once
    kbd = jnp.zeros((HE, HS), f32)                   # kbd[h*dk+e, h*S+s] = K[s, h*dk+e]
    vbd = jnp.zeros((HS, HE), f32)                   # vbd[h*S+s, h*dk+e] = V[s, h*dk+e]
    seg = jnp.zeros((HS, HE), f32)                   # ones within each head block
    for h in range(N_HEADS):
        kbd = kbd.at[h * D_KEYS:(h + 1) * D_KEYS,
                     h * NUM_TOKENS:(h + 1) * NUM_TOKENS].set(K[:, h * D_KEYS:(h + 1) * D_KEYS].T)
        vbd = vbd.at[h * NUM_TOKENS:(h + 1) * NUM_TOKENS,
                     h * D_KEYS:(h + 1) * D_KEYS].set(V[:, h * D_KEYS:(h + 1) * D_KEYS])
        seg = seg.at[h * NUM_TOKENS:(h + 1) * NUM_TOKENS,
                     h * D_KEYS:(h + 1) * D_KEYS].set(1.0)

    # ---- fold out-projection (identity-LLM + [:, :, :d_ff] slice) into FlattenHead ----
    # whT[p, f, t] = wh[t, f*P + p]  (flatten(start_dim=-2) column permutation)
    whT = jnp.transpose(p["wh"].reshape(PRED_LEN, D_FF, PATCH_NUMS), (2, 1, 0))      # (P, D_FF, PRED)
    wo_t = p["wo"][:D_FF, :].astype(f32)                                             # (D_FF, HE)
    who = jnp.einsum("fc,pft->pct", wo_t, whT)                                       # (P, HE, PRED)
    bh_fold = (p["bh"].reshape(1, PRED_LEN)
               + jnp.einsum("f,pft->t", p["bo"][:D_FF], whT).reshape(1, PRED_LEN))   # (1, PRED)

    return dict(wq_all=wq_all, bq_all=bq_all, kbd=kbd, vbd=vbd, seg=seg,
                who=who, bh_fold=bh_fold)


# ------------------------------- forward pass -------------------------------------
def forward(kp, x_enc):
    """x_enc: (B, T, N) -> (B, pred_len, N)."""
    Bb, Tt, Nn = x_enc.shape
    bn = Bb * Nn

    # TODO(synk): prompt-statistics string, HF tokenizer and the prompt embeddings
    # (plus their concat into the LLM input) have no Pallas equivalent; skipped.

    # Pure layout plumbing (one tiny op each): (B,T,N) -> (B*N, T) -> replication pad.
    x = jnp.transpose(x_enc, (0, 2, 1)).reshape(bn, Tt)
    x_pad = jnp.concatenate([x, jnp.repeat(x[:, -1:], STRIDE, axis=1)], axis=1)  # (BN, T+stride)
    x_pad = x_pad.astype(jnp.float32)

    # Single grid-less pallas_call: whole-array blocks in VMEM, no double-buffering,
    # no redundant per-grid-step recompute (v7x head-split is unnecessary now that the
    # heavy K/V / mapping-layer FLOPs are precomputed offline).
    out = pl.pallas_call(
        _timellm_kernel,
        out_shape=jax.ShapeDtypeStruct((bn, PRED_LEN), jnp.float32),
    )(x_pad, kp["wq_all"], kp["bq_all"], kp["kbd"], kp["vbd"], kp["seg"],
      kp["who"], kp["bh_fold"])

    out = out.reshape(Bb, Nn, PRED_LEN)
    out = jnp.transpose(out, (0, 2, 1))              # (B, pred_len, N)
    return out[:, -PRED_LEN:, :]


# ----------------------------------- main ------------------------------------------
if __name__ == "__main__":
    key = jax.random.PRNGKey(0)
    pkey, xkey = jax.random.split(key)
    params = init_params(pkey)
    kparams = pack_kernel_params(params)             # one-time offline weight folding

    x_enc = jax.random.normal(xkey, (B, T, N_VARS), dtype=jnp.float32)
    x_mark_enc = jnp.zeros((B, T, 1), jnp.float32)         # unused by forecast
    x_mark_dec = jnp.zeros((B, PRED_LEN, 1), jnp.float32)  # unused by forecast

    out = jax.jit(forward)(kparams, x_enc)
    out = jax.block_until_ready(out)
    assert out.shape == (B, PRED_LEN, N_VARS), out.shape
    assert bool(jnp.all(jnp.isfinite(out)))
    print("KERNEL_OK")
</pallas_src>

<mosaic_0001>
module attributes {stable_mosaic.version = 11 : i64} {
  func.func @_timellm_kernel(%arg0: memref<8x40xf32, #tpu.memory_space<vmem>>, %arg1: memref<40x640xf32, #tpu.memory_space<vmem>>, %arg2: memref<1x640xf32, #tpu.memory_space<vmem>>, %arg3: memref<128x256xf32, #tpu.memory_space<vmem>>, %arg4: memref<256x128xf32, #tpu.memory_space<vmem>>, %arg5: memref<256x128xf32, #tpu.memory_space<vmem>>, %arg6: memref<5x128x16xf32, #tpu.memory_space<vmem>>, %arg7: memref<1x16xf32, #tpu.memory_space<vmem>>, %arg8: memref<8x16xf32, #tpu.memory_space<vmem>>) attributes {dimension_semantics = [], scalar_prefetch = 0 : i64, scratch_operands = 0 : i64, tpu.core_type = #tpu.core_type<tc>} {
    %c0 = arith.constant 0 : index
    %c0_0 = arith.constant 0 : index
    %0 = vector.load %arg0[%c0, %c0_0] : memref<8x40xf32, #tpu.memory_space<vmem>>, vector<8x40xf32>
    %1 = vector.extract_strided_slice %0 {offsets = [0, 0], sizes = [8, 32], strides = [1, 1]} : vector<8x40xf32> to vector<8x32xf32>
    %cst = arith.constant dense<0.000000e+00> : vector<8xf32>
    %2 = vector.multi_reduction <add>, %1, %cst [1] : vector<8x32xf32> to vector<8xf32>
    %3 = vector.shape_cast %2 : vector<8xf32> to vector<8x1xf32>
    %cst_1 = arith.constant 3.200000e+01 : f32
    %4 = vector.broadcast %cst_1 : f32 to vector<8x1xf32>
    %5 = arith.divf %3, %4 : vector<8x1xf32>
    %6 = vector.broadcast %5 : vector<8x1xf32> to vector<8x32xf32>
    %7 = arith.subf %1, %6 : vector<8x32xf32>
    %8 = arith.mulf %7, %7 : vector<8x32xf32>
    %cst_2 = arith.constant dense<0.000000e+00> : vector<8xf32>
    %9 = vector.multi_reduction <add>, %8, %cst_2 [1] : vector<8x32xf32> to vector<8xf32>
    %10 = vector.shape_cast %9 : vector<8xf32> to vector<8x1xf32>
    %cst_3 = arith.constant 3.200000e+01 : f32
    %11 = vector.broadcast %cst_3 : f32 to vector<8x1xf32>
    %12 = arith.divf %10, %11 : vector<8x1xf32>
    %cst_4 = arith.constant 9.99999974E-6 : f32
    %13 = vector.broadcast %cst_4 : f32 to vector<8x1xf32>
    %14 = arith.addf %12, %13 : vector<8x1xf32>
    %15 = math.sqrt %14 : vector<8x1xf32>
    %16 = vector.broadcast %5 : vector<8x1xf32> to vector<8x40xf32>
    %17 = arith.subf %0, %16 : vector<8x40xf32>
    %18 = vector.broadcast %15 : vector<8x1xf32> to vector<8x40xf32>
    %19 = arith.divf %17, %18 : vector<8x40xf32>
    %c0_5 = arith.constant 0 : index
    %c0_6 = arith.constant 0 : index
    %20 = vector.load %arg1[%c0_5, %c0_6] : memref<40x640xf32, #tpu.memory_space<vmem>>, vector<40x640xf32>
    %cst_7 = arith.constant dense<0.000000e+00> : vector<8x640xf32>
    %21 = tpu.matmul %19, %20, %cst_7 {dimension_numbers = #tpu.dot_dimension_numbers<[1], [0], [0], [1], [0, 0, 1, 1], [], []>} : vector<8x40xf32>, vector<40x640xf32>, vector<8x640xf32> -> vector<8x640xf32>
    %c0_8 = arith.constant 0 : index
    %c0_9 = arith.constant 0 : index
    %22 = vector.load %arg2[%c0_8, %c0_9] : memref<1x640xf32, #tpu.memory_space<vmem>>, vector<1x640xf32>
    %23 = vector.broadcast %22 : vector<1x640xf32> to vector<8x640xf32>
    %24 = arith.addf %21, %23 : vector<8x640xf32>
    %25 = vector.extract_strided_slice %24 {offsets = [0, 0], sizes = [8, 128], strides = [1, 1]} : vector<8x640xf32> to vector<8x128xf32>
    %26 = vector.extract_strided_slice %24 {offsets = [0, 128], sizes = [8, 128], strides = [1, 1]} : vector<8x640xf32> to vector<8x128xf32>
    %27 = vector.extract_strided_slice %24 {offsets = [0, 256], sizes = [8, 128], strides = [1, 1]} : vector<8x640xf32> to vector<8x128xf32>
    %28 = vector.extract_strided_slice %24 {offsets = [0, 384], sizes = [8, 128], strides = [1, 1]} : vector<8x640xf32> to vector<8x128xf32>
    %29 = vector.extract_strided_slice %24 {offsets = [0, 512], sizes = [8, 128], strides = [1, 1]} : vector<8x640xf32> to vector<8x128xf32>
    %30 = tpu.concatenate %25, %26, %27, %28, %29 in 0 : vector<8x128xf32>, vector<8x128xf32>, vector<8x128xf32>, vector<8x128xf32>, vector<8x128xf32> -> vector<40x128xf32>
    %c0_10 = arith.constant 0 : index
    %c0_11 = arith.constant 0 : index
    %31 = vector.load %arg3[%c0_10, %c0_11] : memref<128x256xf32, #tpu.memory_space<vmem>>, vector<128x256xf32>
    %cst_12 = arith.constant dense<0.000000e+00> : vector<40x256xf32>
    %32 = tpu.matmul %30, %31, %cst_12 {dimension_numbers = #tpu.dot_dimension_numbers<[1], [0], [0], [1], [0, 0, 1, 1], [], []>} : vector<40x128xf32>, vector<128x256xf32>, vector<40x256xf32> -> vector<40x256xf32>
    %cst_13 = arith.constant dense<0xFF800000> : vector<40xf32>
    %33 = vector.multi_reduction <maximumf>, %32, %cst_13 [1] : vector<40x256xf32> to vector<40xf32>
    %34 = vector.shape_cast %33 : vector<40xf32> to vector<40x1xf32>
    %35 = vector.broadcast %34 : vector<40x1xf32> to vector<40x256xf32>
    %36 = arith.subf %32, %35 : vector<40x256xf32>
    %37 = math.exp %36 : vector<40x256xf32>
    %c0_14 = arith.constant 0 : index
    %c0_15 = arith.constant 0 : index
    %38 = vector.load %arg4[%c0_14, %c0_15] : memref<256x128xf32, #tpu.memory_space<vmem>>, vector<256x128xf32>
    %cst_16 = arith.constant dense<0.000000e+00> : vector<40x128xf32>
    %39 = tpu.matmul %37, %38, %cst_16 {dimension_numbers = #tpu.dot_dimension_numbers<[1], [0], [0], [1], [0, 0, 1, 1], [], []>} : vector<40x256xf32>, vector<256x128xf32>, vector<40x128xf32> -> vector<40x128xf32>
    %c0_17 = arith.constant 0 : index
    %c0_18 = arith.constant 0 : index
    %40 = vector.load %arg5[%c0_17, %c0_18] : memref<256x128xf32, #tpu.memory_space<vmem>>, vector<256x128xf32>
    %cst_19 = arith.constant dense<0.000000e+00> : vector<40x128xf32>
    %41 = tpu.matmul %37, %40, %cst_19 {dimension_numbers = #tpu.dot_dimension_numbers<[1], [0], [0], [1], [0, 0, 1, 1], [], []>} : vector<40x256xf32>, vector<256x128xf32>, vector<40x128xf32> -> vector<40x128xf32>
    %42 = tpu.reciprocal %41 {approx = true} : vector<40x128xf32> -> vector<40x128xf32>
    %43 = arith.mulf %39, %42 : vector<40x128xf32>
    %c0_20 = arith.constant 0 : index
    %c0_21 = arith.constant 0 : index
    %44 = vector.load %arg7[%c0_20, %c0_21] : memref<1x16xf32, #tpu.memory_space<vmem>>, vector<1x16xf32>
    %45 = vector.extract_strided_slice %43 {offsets = [0, 0], sizes = [8, 128], strides = [1, 1]} : vector<40x128xf32> to vector<8x128xf32>
    %c0_22 = arith.constant 0 : index
    %c0_23 = arith.constant 0 : index
    %c0_24 = arith.constant 0 : index
    %46 = vector.load %arg6[%c0_22, %c0_23, %c0_24] : memref<5x128x16xf32, #tpu.memory_space<vmem>>, vector<1x128x16xf32>
    %47 = vector.shape_cast %46 : vector<1x128x16xf32> to vector<128x16xf32>
    %cst_25 = arith.constant dense<0.000000e+00> : vector<8x16xf32>
    %48 = tpu.matmul %45, %47, %cst_25 {dimension_numbers = #tpu.dot_dimension_numbers<[1], [0], [0], [1], [0, 0, 1, 1], [], []>} : vector<8x128xf32>, vector<128x16xf32>, vector<8x16xf32> -> vector<8x16xf32>
    %49 = vector.broadcast %44 : vector<1x16xf32> to vector<8x16xf32>
    %50 = arith.addf %49, %48 : vector<8x16xf32>
    %51 = vector.extract_strided_slice %43 {offsets = [8, 0], sizes = [8, 128], strides = [1, 1]} : vector<40x128xf32> to vector<8x128xf32>
    %c1 = arith.constant 1 : index
    %c0_26 = arith.constant 0 : index
    %c0_27 = arith.constant 0 : index
    %52 = vector.load %arg6[%c1, %c0_26, %c0_27] : memref<5x128x16xf32, #tpu.memory_space<vmem>>, vector<1x128x16xf32>
    %53 = vector.shape_cast %52 : vector<1x128x16xf32> to vector<128x16xf32>
    %cst_28 = arith.constant dense<0.000000e+00> : vector<8x16xf32>
    %54 = tpu.matmul %51, %53, %cst_28 {dimension_numbers = #tpu.dot_dimension_numbers<[1], [0], [0], [1], [0, 0, 1, 1], [], []>} : vector<8x128xf32>, vector<128x16xf32>, vector<8x16xf32> -> vector<8x16xf32>
    %55 = arith.addf %50, %54 : vector<8x16xf32>
    %56 = vector.extract_strided_slice %43 {offsets = [16, 0], sizes = [8, 128], strides = [1, 1]} : vector<40x128xf32> to vector<8x128xf32>
    %c2 = arith.constant 2 : index
    %c0_29 = arith.constant 0 : index
    %c0_30 = arith.constant 0 : index
    %57 = vector.load %arg6[%c2, %c0_29, %c0_30] : memref<5x128x16xf32, #tpu.memory_space<vmem>>, vector<1x128x16xf32>
    %58 = vector.shape_cast %57 : vector<1x128x16xf32> to vector<128x16xf32>
    %cst_31 = arith.constant dense<0.000000e+00> : vector<8x16xf32>
    %59 = tpu.matmul %56, %58, %cst_31 {dimension_numbers = #tpu.dot_dimension_numbers<[1], [0], [0], [1], [0, 0, 1, 1], [], []>} : vector<8x128xf32>, vector<128x16xf32>, vector<8x16xf32> -> vector<8x16xf32>
    %60 = arith.addf %55, %59 : vector<8x16xf32>
    %61 = vector.extract_strided_slice %43 {offsets = [24, 0], sizes = [8, 128], strides = [1, 1]} : vector<40x128xf32> to vector<8x128xf32>
    %c3 = arith.constant 3 : index
    %c0_32 = arith.constant 0 : index
    %c0_33 = arith.constant 0 : index
    %62 = vector.load %arg6[%c3, %c0_32, %c0_33] : memref<5x128x16xf32, #tpu.memory_space<vmem>>, vector<1x128x16xf32>
    %63 = vector.shape_cast %62 : vector<1x128x16xf32> to vector<128x16xf32>
    %cst_34 = arith.constant dense<0.000000e+00> : vector<8x16xf32>
    %64 = tpu.matmul %61, %63, %cst_34 {dimension_numbers = #tpu.dot_dimension_numbers<[1], [0], [0], [1], [0, 0, 1, 1], [], []>} : vector<8x128xf32>, vector<128x16xf32>, vector<8x16xf32> -> vector<8x16xf32>
    %65 = arith.addf %60, %64 : vector<8x16xf32>
    %66 = vector.extract_strided_slice %43 {offsets = [32, 0], sizes = [8, 128], strides = [1, 1]} : vector<40x128xf32> to vector<8x128xf32>
    %c4 = arith.constant 4 : index
    %c0_35 = arith.constant 0 : index
    %c0_36 = arith.constant 0 : index
    %67 = vector.load %arg6[%c4, %c0_35, %c0_36] : memref<5x128x16xf32, #tpu.memory_space<vmem>>, vector<1x128x16xf32>
    %68 = vector.shape_cast %67 : vector<1x128x16xf32> to vector<128x16xf32>
    %cst_37 = arith.constant dense<0.000000e+00> : vector<8x16xf32>
    %69 = tpu.matmul %66, %68, %cst_37 {dimension_numbers = #tpu.dot_dimension_numbers<[1], [0], [0], [1], [0, 0, 1, 1], [], []>} : vector<8x128xf32>, vector<128x16xf32>, vector<8x16xf32> -> vector<8x16xf32>
    %70 = arith.addf %65, %69 : vector<8x16xf32>
    %71 = vector.broadcast %15 : vector<8x1xf32> to vector<8x16xf32>
    %72 = arith.mulf %70, %71 : vector<8x16xf32>
    %73 = vector.broadcast %5 : vector<8x1xf32> to vector<8x16xf32>
    %74 = arith.addf %72, %73 : vector<8x16xf32>
    %c0_38 = arith.constant 0 : index
    %c0_39 = arith.constant 0 : index
    %75 = vector.load %arg8[%c0_38, %c0_39] : memref<8x16xf32, #tpu.memory_space<vmem>>, vector<8x16xf32>
    tpu.vector_store %arg8[%c0_38, %c0_39], %74 {strides = array<i32>} : memref<8x16xf32, #tpu.memory_space<vmem>>, vector<8x16xf32>,
    return
  }
}

</mosaic_0001>

<llo_original>
// kernel: forward.1
$region0: #{forward.1}
  #allocation0 [shape = 'u32[]', space=smem, size = 0x4, offset = 0x4, fixed_abs, tag = 'smem constant byte address 0x4 - core index']
  #allocation1 [shape = 'u32[72,128]{1,0:T(1,128)}', space=vmem, size = 0x9000, scoped, tag = 'internal scratch']
  %s0 = inlined_call_operand.vmem [shape: f32[8,40], index: 0, kind: input, shape index: {}]
  %s1 = inlined_call_operand.vmem [shape: f32[40,640], index: 1, kind: input, shape index: {}]
  %s2 = inlined_call_operand.vmem [shape: f32[1,640], index: 2, kind: input, shape index: {}]
  %s3 = inlined_call_operand.vmem [shape: f32[128,256], index: 3, kind: input, shape index: {}]
  %s4 = inlined_call_operand.vmem [shape: f32[256,128], index: 4, kind: input, shape index: {}]
  %s5 = inlined_call_operand.hbm [shape: f32[256,128], index: 5, kind: input, shape index: {}]
  %s6 = inlined_call_operand.vmem [shape: f32[5,128,16], index: 6, kind: input, shape index: {}]
  %s7 = inlined_call_operand.vmem [shape: f32[1,16], index: 7, kind: input, shape index: {}]
  %s8 = inlined_call_operand.hbm [shape: f32[8,16], index: 8, kind: output, shape index: {}]
  %s9 = sld [smem:[#allocation0]]
  $region46: #{forward.1} parent=0
    _
  %s11 = ssub.s32 1, %s9
  %s12 = scalar_select 0, %s11, %s9
  $region1: #{forward.1} parent=0
    #allocation2 [shape = 'u8[131072]{0}', space=vmem, size = 0x20000, scoped, tag = 'input window, operand 5, single buffered']
    #allocation3 [shape = 's32[1]{0}', space=sflag, size = 0x4, scoped, tag = 'scoped memory for forward.1']
    #allocation4 [shape = 's32[1]{0}', space=sflag, size = 0x4, scoped, tag = 'scoped memory for forward.1']
    #allocation5 [shape = 'u8[4096]{0}', space=vmem, size = 0x1000, scoped, tag = 'output window, operand 0, single buffered']
    %13 = vsyncpa [#allocation3], 0
    %14 = vsyncpa [#allocation4], 0
    // Predicated region
    $region2: #{forward.1} parent=1 // pred_check
      _
    $region3: #{forward.1} parent=1 // pred_check_branch
      %16 = sbr.rel (0) target = $region5
    $region4: #{forward.1} parent=1 // pred_region
      _
    $region5: #{forward.1} parent=1 // pred_fallthru
      _
    // Predicated region
    $region6: #{forward.1} parent=1 // pred_check
      _
    $region7: #{forward.1} parent=1 // pred_check_branch
      %18 = sbr.rel (0) target = $region9
    $region8: #{forward.1} parent=1 // pred_region
      _
    $region9: #{forward.1} parent=1 // pred_fallthru
      _
    // Predicated region
    $region10: #{forward.1} parent=1 // pred_check
      _
    $region11: #{forward.1} parent=1 // pred_check_branch
      %20 = sbr.rel (0) target = $region13
    $region12: #{forward.1} parent=1 // pred_region
      _
    $region13: #{forward.1} parent=1 // pred_fallthru
      _
    // Predicated region
    $region14: #{forward.1} parent=1 // pred_check
      _
    $region15: #{forward.1} parent=1 // pred_check_branch
      %22 = sbr.rel (0) target = $region17
    $region16: #{forward.1} parent=1 // pred_region
      _
    $region17: #{forward.1} parent=1 // pred_fallthru
      _
    // Predicated region
    $region18: #{forward.1} parent=1 // pred_check
      _
    $region19: #{forward.1} parent=1 // pred_check_branch
      %24 = sbr.rel (0) target = $region21
    $region20: #{forward.1} parent=1 // pred_region
      _
    $region21: #{forward.1} parent=1 // pred_fallthru
      _
    // Predicated region
    $region22: #{forward.1} parent=1 // pred_check
      _
    $region23: #{forward.1} parent=1 // pred_check_branch
      %26 = sbr.rel (0) target = $region25
    $region24: #{forward.1} parent=1 // pred_region
      %28 = vsyncadd [#allocation3], 0
      %s29 = sshll.u32 %s5, 4
      %s30 = int_to_ptr.hbm [resolvable:$true] %s29
      %s31 = sshll.u32 [#allocation2], 4
      %s32 = int_to_ptr.vmem [resolvable:$true] %s31
      %37 = dma.hbm_to_vmem [thread:$0]  %s30, 4096, %s32, [#allocation3], 128, 128, 8
    $region25: #{forward.1} parent=1 // pred_fallthru
      _
    // Predicated region
    $region26: #{forward.1} parent=1 // pred_check
      _
    $region27: #{forward.1} parent=1 // pred_check_branch
      %39 = sbr.rel (0) target = $region29
    $region28: #{forward.1} parent=1 // pred_region
      _
    $region29: #{forward.1} parent=1 // pred_fallthru
      _
    // Predicated region
    $region30: #{forward.1} parent=1 // pred_check
      _
    $region31: #{forward.1} parent=1 // pred_check_branch
      %41 = sbr.rel (0) target = $region33
    $region32: #{forward.1} parent=1 // pred_region
      _
    $region33: #{forward.1} parent=1 // pred_fallthru
      _
    // Predicated region
    $region34: #{forward.1} parent=1 // pred_check
      _
    $region35: #{forward.1} parent=1 // pred_check_branch
      %43 = sbr.rel (0) target = $region37
    $region36: #{forward.1} parent=1 // pred_region
      %45 = dma.done [#allocation3], 4096
    $region37: #{forward.1} parent=1 // pred_fallthru
      _
    %v46 = vld [vmem:[%s0] sm:$0xff]
    %vm47 = vcmask 261120
    %v48 = vsel %vm47, %v46, 0.0
    %49 = vadd.xlane.f32.xlu0 %v48
    %v50 = vpop.xlane.xlu0 %49
    %v51 = vrcp.pop 32.0
    %v52 = vmul.f32 32.0, %v51
    %v53 = vsub.f32 1.0, %v52
    %v54 = vmul.f32 %v51, %v53
    %v55 = vadd.f32 %v51, %v54
    %vm56 = vweird.f32 %v51
    %v57 = vsel %vm56, %v51, %v55
    %v58 = vmul.f32 %v50, %v57
    %v59 = vsub.f32 %v46, %v58
    %v60 = vmul.f32 %v59, %v59
    %v61 = vsel %vm47, %v60, 0.0
    %62 = vadd.xlane.f32.xlu0 %v61
    %v63 = vpop.xlane.xlu0 %62
    %v64 = vmul.f32 %v63, %v57
    %v65 = vadd.f32 %v64, 1e-05
    %v66 = vrsqrt.pop %v65
    %v67 = vmul.f32 %v66, %v65
    %v68 = vmul.f32 %v67, %v66
    %v69 = vmul.f32 0.5, %v68
    %v70 = vsub.f32 1.5, %v69
    %v71 = vmul.f32 %v66, %v70
    %v72 = vmul.f32 %v65, %v71
    %vm73 = vcmp.eq.f32.partialorder %v65, inf
    %v74 = vsel %vm73, %v65, %v72
    %vm75 = vcmp.eq.f32.partialorder %v65, 0.0
    %v76 = vand.u32 %v65, 2147483648
    %v77 = vsel %vm75, %v76, %v74
    %v78 = vrcp.pop %v77
    %v79 = vmul.f32 %v77, %v78
    %v80 = vsub.f32 1.0, %v79
    %v81 = vmul.f32 %v78, %v80
    %v82 = vadd.f32 %v78, %v81
    %vm83 = vweird.f32 %v77
    %vm84 = vweird.f32 %v78
    %vm85 = vmor %vm83, %vm84
    %v86 = vsel %vm85, %v78, %v82
    %v87 = vand.u32 2147483647, %v77
    %vm88 = vcmp.eq.f32.partialorder %v87, 8.507059e+37
    %v89 = vand.u32 %v77, 2147483648
    %v90 = vor.u32 1.1754944e-38, %v89
    %v91 = vsel %vm88, %v90, %v86
    %v92 = vmul.f32 %v59, %v91
    %v93 = vld [vmem:[%s1] sm:$0xff]
    %v94 = vld [vmem:[%s1 + $0x8] sm:$0xff]
    %v95 = vld [vmem:[%s1 + $0x10] sm:$0xff]
    %v96 = vld [vmem:[%s1 + $0x18] sm:$0xff]
    %v97 = vld [vmem:[%s1 + $0x20] sm:$0xff]
    %v98 = vld [vmem:[%s1 + $0x28] sm:$0xff]
    %v99 = vld [vmem:[%s1 + $0x30] sm:$0xff]
    %v100 = vld [vmem:[%s1 + $0x38] sm:$0xff]
    %v101 = vld [vmem:[%s1 + $0x40] sm:$0xff]
    %v102 = vld [vmem:[%s1 + $0x48] sm:$0xff]
    %v103 = vld [vmem:[%s1 + $0x50] sm:$0xff]
    %v104 = vld [vmem:[%s1 + $0x58] sm:$0xff]
    %v105 = vld [vmem:[%s1 + $0x60] sm:$0xff]
    %v106 = vld [vmem:[%s1 + $0x68] sm:$0xff]
    %v107 = vld [vmem:[%s1 + $0x70] sm:$0xff]
    %v108 = vld [vmem:[%s1 + $0x78] sm:$0xff]
    %v109 = vld [vmem:[%s1 + $0x80] sm:$0xff]
    %v110 = vld [vmem:[%s1 + $0x88] sm:$0xff]
    %v111 = vld [vmem:[%s1 + $0x90] sm:$0xff]
    %v112 = vld [vmem:[%s1 + $0x98] sm:$0xff]
    %v113 = vld [vmem:[%s1 + $0xa0] sm:$0xff]
    %v114 = vld [vmem:[%s1 + $0xa8] sm:$0xff]
    %v115 = vld [vmem:[%s1 + $0xb0] sm:$0xff]
    %v116 = vld [vmem:[%s1 + $0xb8] sm:$0xff]
    %v117 = vld [vmem:[%s1 + $0xc0] sm:$0xff]
    %v118 = vld [vmem:[%s2] sm:$0x1f]
    %v120 = vperm.slane %v118, 0
    %v121 = vperm.slane %v118, 1
    %v122 = vperm.slane %v118, 2
    %v123 = vperm.slane %v118, 3
    %v124 = vperm.slane %v118, 4
    %vm130 = vcmask 326656
    %v132 = vsel %vm130, %v92, 0
    %134 = vmatpush.msra.mxu0 0.0
    %135 = vmatpush.msra.mxu0 0.0
    %136 = vmatpush.msra.mxu0 0.0
    %137 = vmatpush.msra.mxu0 0.0
    %138 = vmatpush.msra.mxu0 0.0
    %139 = vmatpush.msra.mxu0 0.0
    %140 = vmatpush.msra.mxu0 0.0
    %141 = vmatpush.msra.mxu0 0.0
    %142 = vmatpush.msra.mxu0 0.0
    %143 = vmatpush.msra.mxu0 0.0
    %144 = vmatpush.msra.mxu0 0.0
    %145 = vmatpush.msra.mxu0 %v113
    %146 = vmatpush.msra.mxu0 %v108
    %147 = vmatpush.msra.mxu0 %v103
    %148 = vmatpush.msra.mxu0 %v98
    %149 = vmatpush.msra.mxu0 %v93
    %150 = vmatmul.f32.gmra.mxu0 %v132
    %v151 = vpop.f32.mrf.mxu0
    %v152 = vadd.f32 %v120, %v151
    %153 = vdwg.mxu0
    %154 = vmatpush.msra.mxu0 0.0
    %155 = vmatpush.msra.mxu0 0.0
    %156 = vmatpush.msra.mxu0 0.0
    %157 = vmatpush.msra.mxu0 0.0
    %158 = vmatpush.msra.mxu0 0.0
    %159 = vmatpush.msra.mxu0 0.0
    %160 = vmatpush.msra.mxu0 0.0
    %161 = vmatpush.msra.mxu0 0.0
    %162 = vmatpush.msra.mxu0 0.0
    %163 = vmatpush.msra.mxu0 0.0
    %164 = vmatpush.msra.mxu0 0.0
    %165 = vmatpush.msra.mxu0 %v114
    %166 = vmatpush.msra.mxu0 %v109
    %167 = vmatpush.msra.mxu0 %v104
    %168 = vmatpush.msra.mxu0 %v99
    %169 = vmatpush.msra.mxu0 %v94
    %170 = vmatmul.f32.gmra.mxu0 %v132
    %v171 = vpop.f32.mrf.mxu0
    %v172 = vadd.f32 %v121, %v171
    %173 = vdwg.mxu0
    %174 = vmatpush.msra.mxu0 0.0
    %175 = vmatpush.msra.mxu0 0.0
    %176 = vmatpush.msra.mxu0 0.0
    %177 = vmatpush.msra.mxu0 0.0
    %178 = vmatpush.msra.mxu0 0.0
    %179 = vmatpush.msra.mxu0 0.0
    %180 = vmatpush.msra.mxu0 0.0
    %181 = vmatpush.msra.mxu0 0.0
    %182 = vmatpush.msra.mxu0 0.0
    %183 = vmatpush.msra.mxu0 0.0
    %184 = vmatpush.msra.mxu0 0.0
    %185 = vmatpush.msra.mxu0 %v115
    %186 = vmatpush.msra.mxu0 %v110
    %187 = vmatpush.msra.mxu0 %v105
    %188 = vmatpush.msra.mxu0 %v100
    %189 = vmatpush.msra.mxu0 %v95
    %190 = vmatmul.f32.gmra.mxu0 %v132
    %v191 = vpop.f32.mrf.mxu0
    %v192 = vadd.f32 %v122, %v191
    %193 = vdwg.mxu0
    %194 = vmatpush.msra.mxu0 0.0
    %195 = vmatpush.msra.mxu0 0.0
    %196 = vmatpush.msra.mxu0 0.0
    %197 = vmatpush.msra.mxu0 0.0
    %198 = vmatpush.msra.mxu0 0.0
    %199 = vmatpush.msra.mxu0 0.0
    %200 = vmatpush.msra.mxu0 0.0
    %201 = vmatpush.msra.mxu0 0.0
    %202 = vmatpush.msra.mxu0 0.0
    %203 = vmatpush.msra.mxu0 0.0
    %204 = vmatpush.msra.mxu0 0.0
    %205 = vmatpush.msra.mxu0 %v116
    %206 = vmatpush.msra.mxu0 %v111
    %207 = vmatpush.msra.mxu0 %v106
    %208 = vmatpush.msra.mxu0 %v101
    %209 = vmatpush.msra.mxu0 %v96
    %210 = vmatmul.f32.gmra.mxu0 %v132
    %v211 = vpop.f32.mrf.mxu0
    %v212 = vadd.f32 %v123, %v211
    %213 = vdwg.mxu0
    %214 = vmatpush.msra.mxu0 0.0
    %215 = vmatpush.msra.mxu0 0.0
    %216 = vmatpush.msra.mxu0 0.0
    %217 = vmatpush.msra.mxu0 0.0
    %218 = vmatpush.msra.mxu0 0.0
    %219 = vmatpush.msra.mxu0 0.0
    %220 = vmatpush.msra.mxu0 0.0
    %221 = vmatpush.msra.mxu0 0.0
    %222 = vmatpush.msra.mxu0 0.0
    %223 = vmatpush.msra.mxu0 0.0
    %224 = vmatpush.msra.mxu0 0.0
    %225 = vmatpush.msra.mxu0 %v117
    %226 = vmatpush.msra.mxu0 %v112
    %227 = vmatpush.msra.mxu0 %v107
    %228 = vmatpush.msra.mxu0 %v102
    %229 = vmatpush.msra.mxu0 %v97
    %230 = vmatmul.f32.gmra.mxu0 %v132
    %v231 = vpop.f32.mrf.mxu0
    %v232 = vadd.f32 %v124, %v231
    %233 = vdwg.mxu0
    %v234 = vld [vmem:[%s3] sm:$0xff]
    %v235 = vld [vmem:[%s3 + $0x8] sm:$0xff]
    %v236 = vld [vmem:[%s3 + $0x10] sm:$0xff]
    %v237 = vld [vmem:[%s3 + $0x18] sm:$0xff]
    %v238 = vld [vmem:[%s3 + $0x20] sm:$0xff]
    %v239 = vld [vmem:[%s3 + $0x28] sm:$0xff]
    %v240 = vld [vmem:[%s3 + $0x30] sm:$0xff]
    %v241 = vld [vmem:[%s3 + $0x38] sm:$0xff]
    %v242 = vld [vmem:[%s3 + $0x40] sm:$0xff]
    %v243 = vld [vmem:[%s3 + $0x48] sm:$0xff]
    %v244 = vld [vmem:[%s3 + $0x50] sm:$0xff]
    %v245 = vld [vmem:[%s3 + $0x58] sm:$0xff]
    %v246 = vld [vmem:[%s3 + $0x60] sm:$0xff]
    %v247 = vld [vmem:[%s3 + $0x68] sm:$0xff]
    %v248 = vld [vmem:[%s3 + $0x70] sm:$0xff]
    %v249 = vld [vmem:[%s3 + $0x78] sm:$0xff]
    %v250 = vld [vmem:[%s3 + $0x80] sm:$0xff]
    %v251 = vld [vmem:[%s3 + $0x88] sm:$0xff]
    %v252 = vld [vmem:[%s3 + $0x90] sm:$0xff]
    %v253 = vld [vmem:[%s3 + $0x98] sm:$0xff]
    %v254 = vld [vmem:[%s3 + $0xa0] sm:$0xff]
    %v255 = vld [vmem:[%s3 + $0xa8] sm:$0xff]
    %v256 = vld [vmem:[%s3 + $0xb0] sm:$0xff]
    %v257 = vld [vmem:[%s3 + $0xb8] sm:$0xff]
    %v258 = vld [vmem:[%s3 + $0xc0] sm:$0xff]
    %v259 = vld [vmem:[%s3 + $0xc8] sm:$0xff]
    %v260 = vld [vmem:[%s3 + $0xd0] sm:$0xff]
    %v261 = vld [vmem:[%s3 + $0xd8] sm:$0xff]
    %v262 = vld [vmem:[%s3 + $0xe0] sm:$0xff]
    %v263 = vld [vmem:[%s3 + $0xe8] sm:$0xff]
    %v264 = vld [vmem:[%s3 + $0xf0] sm:$0xff]
    %v265 = vld [vmem:[%s3 + $0xf8] sm:$0xff]
    %266 = vmatpush.msra.mxu0 %v264
    %267 = vmatpush.msra.mxu0 %v262
    %268 = vmatpush.msra.mxu0 %v260
    %269 = vmatpush.msra.mxu0 %v258
    %270 = vmatpush.msra.mxu0 %v256
    %271 = vmatpush.msra.mxu0 %v254
    %272 = vmatpush.msra.mxu0 %v252
    %273 = vmatpush.msra.mxu0 %v250
    %274 = vmatpush.msra.mxu0 %v248
    %275 = vmatpush.msra.mxu0 %v246
    %276 = vmatpush.msra.mxu0 %v244
    %277 = vmatpush.msra.mxu0 %v242
    %278 = vmatpush.msra.mxu0 %v240
    %279 = vmatpush.msra.mxu0 %v238
    %280 = vmatpush.msra.mxu0 %v236
    %281 = vmatpush.msra.mxu0 %v234
    %282 = vmatmul.f32.gmra.mxu0 %v152
    %v283 = vpop.f32.mrf.mxu0
    %v284 = vadd.f32 0.0, %v283
    %285 = vmatmul.f32.gmra.mxu0 %v172
    %v286 = vpop.f32.mrf.mxu0
    %v287 = vadd.f32 0.0, %v286
    %288 = vmatmul.f32.gmra.mxu0 %v192
    %v289 = vpop.f32.mrf.mxu0
    %v290 = vadd.f32 0.0, %v289
    %291 = vmatmul.f32.gmra.mxu0 %v212
    %v292 = vpop.f32.mrf.mxu0
    %v293 = vadd.f32 0.0, %v292
    %294 = vmatmul.f32.gmra.mxu0 %v232
    %v295 = vpop.f32.mrf.mxu0
    %v296 = vadd.f32 0.0, %v295
    %297 = vdwg.mxu0
    %298 = vmatpush.msra.mxu0 %v265
    %299 = vmatpush.msra.mxu0 %v263
    %300 = vmatpush.msra.mxu0 %v261
    %301 = vmatpush.msra.mxu0 %v259
    %302 = vmatpush.msra.mxu0 %v257
    %303 = vmatpush.msra.mxu0 %v255
    %304 = vmatpush.msra.mxu0 %v253
    %305 = vmatpush.msra.mxu0 %v251
    %306 = vmatpush.msra.mxu0 %v249
    %307 = vmatpush.msra.mxu0 %v247
    %308 = vmatpush.msra.mxu0 %v245
    %309 = vmatpush.msra.mxu0 %v243
    %310 = vmatpush.msra.mxu0 %v241
    %311 = vmatpush.msra.mxu0 %v239
    %312 = vmatpush.msra.mxu0 %v237
    %313 = vmatpush.msra.mxu0 %v235
    %314 = vmatmul.f32.gmra.mxu0 %v152
    %v315 = vpop.f32.mrf.mxu0
    %v316 = vadd.f32 0.0, %v315
    %317 = vmatmul.f32.gmra.mxu0 %v172
    %v318 = vpop.f32.mrf.mxu0
    %v319 = vadd.f32 0.0, %v318
    %320 = vmatmul.f32.gmra.mxu0 %v192
    %v321 = vpop.f32.mrf.mxu0
    %v322 = vadd.f32 0.0, %v321
    %323 = vmatmul.f32.gmra.mxu0 %v212
    %v324 = vpop.f32.mrf.mxu0
    %v325 = vadd.f32 0.0, %v324
    %326 = vmatmul.f32.gmra.mxu0 %v232
    %v327 = vpop.f32.mrf.mxu0
    %v328 = vadd.f32 0.0, %v327
    %329 = vdwg.mxu0
    %v330 = vmax.f32 %v284, %v316
    %331 = vmax.xlane.f32.xlu0 %v330
    %v332 = vpop.xlane.xlu0 %331
    %v333 = vmax.f32 %v287, %v319
    %334 = vmax.xlane.f32.xlu0 %v333
    %v335 = vpop.xlane.xlu0 %334
    %v336 = vmax.f32 %v290, %v322
    %337 = vmax.xlane.f32.xlu0 %v336
    %v338 = vpop.xlane.xlu0 %337
    %v339 = vmax.f32 %v293, %v325
    %340 = vmax.xlane.f32.xlu0 %v339
    %v341 = vpop.xlane.xlu0 %340
    %v342 = vmax.f32 %v296, %v328
    %343 = vmax.xlane.f32.xlu0 %v342
    %v344 = vpop.xlane.xlu0 %343
    %v345 = vsub.f32 %v284, %v332
    %v346 = vsub.f32 %v316, %v332
    %v347 = vsub.f32 %v287, %v335
    %v348 = vsub.f32 %v319, %v335
    %v349 = vsub.f32 %v290, %v338
    %v350 = vsub.f32 %v322, %v338
    %v351 = vsub.f32 %v293, %v341
    %v352 = vsub.f32 %v325, %v341
    %v353 = vsub.f32 %v296, %v344
    %v354 = vsub.f32 %v328, %v344
    %v355 = vmul.f32 %v345, 1.442695
    %v356 = vpow.pop %v355
    %v357 = vmul.f32 %v346, 1.442695
    %v358 = vpow.pop %v357
    %v359 = vmul.f32 %v347, 1.442695
    %v360 = vpow.pop %v359
    %v361 = vmul.f32 %v348, 1.442695
    %v362 = vpow.pop %v361
    %v363 = vmul.f32 %v349, 1.442695
    %v364 = vpow.pop %v363
    %v365 = vmul.f32 %v350, 1.442695
    %v366 = vpow.pop %v365
    %v367 = vmul.f32 %v351, 1.442695
    %v368 = vpow.pop %v367
    %v369 = vmul.f32 %v352, 1.442695
    %v370 = vpow.pop %v369
    %v371 = vmul.f32 %v353, 1.442695
    %v372 = vpow.pop %v371
    %v373 = vmul.f32 %v354, 1.442695
    %v374 = vpow.pop %v373
    %v375 = vld [vmem:[%s4] sm:$0xff]
    %v376 = vld [vmem:[%s4 + $0x8] sm:$0xff]
    %v377 = vld [vmem:[%s4 + $0x10] sm:$0xff]
    %v378 = vld [vmem:[%s4 + $0x18] sm:$0xff]
    %v379 = vld [vmem:[%s4 + $0x20] sm:$0xff]
    %v380 = vld [vmem:[%s4 + $0x28] sm:$0xff]
    %v381 = vld [vmem:[%s4 + $0x30] sm:$0xff]
    %v382 = vld [vmem:[%s4 + $0x38] sm:$0xff]
    %v383 = vld [vmem:[%s4 + $0x40] sm:$0xff]
    %v384 = vld [vmem:[%s4 + $0x48] sm:$0xff]
    %v385 = vld [vmem:[%s4 + $0x50] sm:$0xff]
    %v386 = vld [vmem:[%s4 + $0x58] sm:$0xff]
    %v387 = vld [vmem:[%s4 + $0x60] sm:$0xff]
    %v388 = vld [vmem:[%s4 + $0x68] sm:$0xff]
    %v389 = vld [vmem:[%s4 + $0x70] sm:$0xff]
    %v390 = vld [vmem:[%s4 + $0x78] sm:$0xff]
    %v391 = vld [vmem:[%s4 + $0x80] sm:$0xff]
    %v392 = vld [vmem:[%s4 + $0x88] sm:$0xff]
    %v393 = vld [vmem:[%s4 + $0x90] sm:$0xff]
    %v394 = vld [vmem:[%s4 + $0x98] sm:$0xff]
    %v395 = vld [vmem:[%s4 + $0xa0] sm:$0xff]
    %v396 = vld [vmem:[%s4 + $0xa8] sm:$0xff]
    %v397 = vld [vmem:[%s4 + $0xb0] sm:$0xff]
    %v398 = vld [vmem:[%s4 + $0xb8] sm:$0xff]
    %v399 = vld [vmem:[%s4 + $0xc0] sm:$0xff]
    %v400 = vld [vmem:[%s4 + $0xc8] sm:$0xff]
    %v401 = vld [vmem:[%s4 + $0xd0] sm:$0xff]
    %v402 = vld [vmem:[%s4 + $0xd8] sm:$0xff]
    %v403 = vld [vmem:[%s4 + $0xe0] sm:$0xff]
    %v404 = vld [vmem:[%s4 + $0xe8] sm:$0xff]
    %v405 = vld [vmem:[%s4 + $0xf0] sm:$0xff]
    %v406 = vld [vmem:[%s4 + $0xf8] sm:$0xff]
    %407 = vmatpush.msra.mxu0 %v390
    %408 = vmatpush.msra.mxu0 %v389
    %409 = vmatpush.msra.mxu0 %v388
    %410 = vmatpush.msra.mxu0 %v387
    %411 = vmatpush.msra.mxu0 %v386
    %412 = vmatpush.msra.mxu0 %v385
    %413 = vmatpush.msra.mxu0 %v384
    %414 = vmatpush.msra.mxu0 %v383
    %415 = vmatpush.msra.mxu0 %v382
    %416 = vmatpush.msra.mxu0 %v381
    %417 = vmatpush.msra.mxu0 %v380
    %418 = vmatpush.msra.mxu0 %v379
    %419 = vmatpush.msra.mxu0 %v378
    %420 = vmatpush.msra.mxu0 %v377
    %421 = vmatpush.msra.mxu0 %v376
    %422 = vmatpush.msra.mxu0 %v375
    %423 = vmatmul.f32.gmra.mxu0 %v356
    %v424 = vpop.f32.mrf.mxu0
    %v425 = vadd.f32 0.0, %v424
    %426 = vmatmul.f32.gmra.mxu0 %v360
    %v427 = vpop.f32.mrf.mxu0
    %v428 = vadd.f32 0.0, %v427
    %429 = vmatmul.f32.gmra.mxu0 %v364
    %v430 = vpop.f32.mrf.mxu0
    %v431 = vadd.f32 0.0, %v430
    %432 = vmatmul.f32.gmra.mxu0 %v368
    %v433 = vpop.f32.mrf.mxu0
    %v434 = vadd.f32 0.0, %v433
    %435 = vmatmul.f32.gmra.mxu0 %v372
    %v436 = vpop.f32.mrf.mxu0
    %v437 = vadd.f32 0.0, %v436
    %438 = vdwg.mxu0
    %439 = vmatpush.msra.mxu0 %v406
    %440 = vmatpush.msra.mxu0 %v405
    %441 = vmatpush.msra.mxu0 %v404
    %442 = vmatpush.msra.mxu0 %v403
    %443 = vmatpush.msra.mxu0 %v402
    %444 = vmatpush.msra.mxu0 %v401
    %445 = vmatpush.msra.mxu0 %v400
    %446 = vmatpush.msra.mxu0 %v399
    %447 = vmatpush.msra.mxu0 %v398
    %448 = vmatpush.msra.mxu0 %v397
    %449 = vmatpush.msra.mxu0 %v396
    %450 = vmatpush.msra.mxu0 %v395
    %451 = vmatpush.msra.mxu0 %v394
    %452 = vmatpush.msra.mxu0 %v393
    %453 = vmatpush.msra.mxu0 %v392
    %454 = vmatpush.msra.mxu0 %v391
    %455 = vmatmul.f32.gmra.mxu0 %v358
    %v456 = vpop.f32.mrf.mxu0
    %v457 = vadd.f32 %v425, %v456
    %458 = vmatmul.f32.gmra.mxu0 %v362
    %v459 = vpop.f32.mrf.mxu0
    %v460 = vadd.f32 %v428, %v459
    %461 = vmatmul.f32.gmra.mxu0 %v366
    %v462 = vpop.f32.mrf.mxu0
    %v463 = vadd.f32 %v431, %v462
    %464 = vmatmul.f32.gmra.mxu0 %v370
    %v465 = vpop.f32.mrf.mxu0
    %v466 = vadd.f32 %v434, %v465
    %467 = vmatmul.f32.gmra.mxu0 %v374
    %v468 = vpop.f32.mrf.mxu0
    %v469 = vadd.f32 %v437, %v468
    %470 = vdwg.mxu0
    %v471 = vld [vmem:[#allocation2] sm:$0xff]
    %v472 = vld [vmem:[#allocation2 + $0x8] sm:$0xff]
    %v473 = vld [vmem:[#allocation2 + $0x10] sm:$0xff]
    %v474 = vld [vmem:[#allocation2 + $0x18] sm:$0xff]
    %v475 = vld [vmem:[#allocation2 + $0x20] sm:$0xff]
    %v476 = vld [vmem:[#allocation2 + $0x28] sm:$0xff]
    %v477 = vld [vmem:[#allocation2 + $0x30] sm:$0xff]
    %v478 = vld [vmem:[#allocation2 + $0x38] sm:$0xff]
    %v479 = vld [vmem:[#allocation2 + $0x40] sm:$0xff]
    %v480 = vld [vmem:[#allocation2 + $0x48] sm:$0xff]
    %v481 = vld [vmem:[#allocation2 + $0x50] sm:$0xff]
    %v482 = vld [vmem:[#allocation2 + $0x58] sm:$0xff]
    %v483 = vld [vmem:[#allocation2 + $0x60] sm:$0xff]
    %v484 = vld [vmem:[#allocation2 + $0x68] sm:$0xff]
    %v485 = vld [vmem:[#allocation2 + $0x70] sm:$0xff]
    %v486 = vld [vmem:[#allocation2 + $0x78] sm:$0xff]
    %v487 = vld [vmem:[#allocation2 + $0x80] sm:$0xff]
    %v488 = vld [vmem:[#allocation2 + $0x88] sm:$0xff]
    %v489 = vld [vmem:[#allocation2 + $0x90] sm:$0xff]
    %v490 = vld [vmem:[#allocation2 + $0x98] sm:$0xff]
    %v491 = vld [vmem:[#allocation2 + $0xa0] sm:$0xff]
    %v492 = vld [vmem:[#allocation2 + $0xa8] sm:$0xff]
    %v493 = vld [vmem:[#allocation2 + $0xb0] sm:$0xff]
    %v494 = vld [vmem:[#allocation2 + $0xb8] sm:$0xff]
    %v495 = vld [vmem:[#allocation2 + $0xc0] sm:$0xff]
    %v496 = vld [vmem:[#allocation2 + $0xc8] sm:$0xff]
    %v497 = vld [vmem:[#allocation2 + $0xd0] sm:$0xff]
    %v498 = vld [vmem:[#allocation2 + $0xd8] sm:$0xff]
    %v499 = vld [vmem:[#allocation2 + $0xe0] sm:$0xff]
    %v500 = vld [vmem:[#allocation2 + $0xe8] sm:$0xff]
    %v501 = vld [vmem:[#allocation2 + $0xf0] sm:$0xff]
    %v502 = vld [vmem:[#allocation2 + $0xf8] sm:$0xff]
    %503 = vmatpush.msra.mxu0 %v486
    %504 = vmatpush.msra.mxu0 %v485
    %505 = vmatpush.msra.mxu0 %v484
    %506 = vmatpush.msra.mxu0 %v483
    %507 = vmatpush.msra.mxu0 %v482
    %508 = vmatpush.msra.mxu0 %v481
    %509 = vmatpush.msra.mxu0 %v480
    %510 = vmatpush.msra.mxu0 %v479
    %511 = vmatpush.msra.mxu0 %v478
    %512 = vmatpush.msra.mxu0 %v477
    %513 = vmatpush.msra.mxu0 %v476
    %514 = vmatpush.msra.mxu0 %v475
    %515 = vmatpush.msra.mxu0 %v474
    %516 = vmatpush.msra.mxu0 %v473
    %517 = vmatpush.msra.mxu0 %v472
    %518 = vmatpush.msra.mxu0 %v471
    %519 = vmatmul.f32.gmra.mxu0 %v356
    %v520 = vpop.f32.mrf.mxu0
    %v521 = vadd.f32 0.0, %v520
    %522 = vmatmul.f32.gmra.mxu0 %v360
    %v523 = vpop.f32.mrf.mxu0
    %v524 = vadd.f32 0.0, %v523
    %525 = vmatmul.f32.gmra.mxu0 %v364
    %v526 = vpop.f32.mrf.mxu0
    %v527 = vadd.f32 0.0, %v526
    %528 = vmatmul.f32.gmra.mxu0 %v368
    %v529 = vpop.f32.mrf.mxu0
    %v530 = vadd.f32 0.0, %v529
    %531 = vmatmul.f32.gmra.mxu0 %v372
    %v532 = vpop.f32.mrf.mxu0
    %v533 = vadd.f32 0.0, %v532
    %534 = vdwg.mxu0
    %535 = vmatpush.msra.mxu0 %v502
    %536 = vmatpush.msra.mxu0 %v501
    %537 = vmatpush.msra.mxu0 %v500
    %538 = vmatpush.msra.mxu0 %v499
    %539 = vmatpush.msra.mxu0 %v498
    %540 = vmatpush.msra.mxu0 %v497
    %541 = vmatpush.msra.mxu0 %v496
    %542 = vmatpush.msra.mxu0 %v495
    %543 = vmatpush.msra.mxu0 %v494
    %544 = vmatpush.msra.mxu0 %v493
    %545 = vmatpush.msra.mxu0 %v492
    %546 = vmatpush.msra.mxu0 %v491
    %547 = vmatpush.msra.mxu0 %v490
    %548 = vmatpush.msra.mxu0 %v489
    %549 = vmatpush.msra.mxu0 %v488
    %550 = vmatpush.msra.mxu0 %v487
    %551 = vmatmul.f32.gmra.mxu0 %v358
    %v552 = vpop.f32.mrf.mxu0
    %v553 = vadd.f32 %v521, %v552
    %554 = vmatmul.f32.gmra.mxu0 %v362
    %v555 = vpop.f32.mrf.mxu0
    %v556 = vadd.f32 %v524, %v555
    %557 = vmatmul.f32.gmra.mxu0 %v366
    %v558 = vpop.f32.mrf.mxu0
    %v559 = vadd.f32 %v527, %v558
    %560 = vmatmul.f32.gmra.mxu0 %v370
    %v561 = vpop.f32.mrf.mxu0
    %v562 = vadd.f32 %v530, %v561
    %563 = vmatmul.f32.gmra.mxu0 %v374
    %v564 = vpop.f32.mrf.mxu0
    %v565 = vadd.f32 %v533, %v564
    %566 = vdwg.mxu0
    %v567 = vrcp.pop %v553
    %v568 = vrcp.pop %v556
    %v569 = vrcp.pop %v559
    %v570 = vrcp.pop %v562
    %v571 = vrcp.pop %v565
    %v572 = vmul.f32 %v457, %v567
    %v573 = vmul.f32 %v460, %v568
    %v574 = vmul.f32 %v463, %v569
    %v575 = vmul.f32 %v466, %v570
    %v576 = vmul.f32 %v469, %v571
    %v577 = vld [vmem:[%s7] sm:$0x1]
    %v578 = vld [vmem:[%s6] sm:$0xff]
    %v579 = vld [vmem:[%s6 + $0x8] sm:$0xff]
    %v580 = vld [vmem:[%s6 + $0x10] sm:$0xff]
    %v581 = vld [vmem:[%s6 + $0x18] sm:$0xff]
    %v582 = vld [vmem:[%s6 + $0x20] sm:$0xff]
    %v583 = vld [vmem:[%s6 + $0x28] sm:$0xff]
    %v584 = vld [vmem:[%s6 + $0x30] sm:$0xff]
    %v585 = vld [vmem:[%s6 + $0x38] sm:$0xff]
    %v586 = vld [vmem:[%s6 + $0x40] sm:$0xff]
    %v587 = vld [vmem:[%s6 + $0x48] sm:$0xff]
    %v588 = vld [vmem:[%s6 + $0x50] sm:$0xff]
    %v589 = vld [vmem:[%s6 + $0x58] sm:$0xff]
    %v590 = vld [vmem:[%s6 + $0x60] sm:$0xff]
    %v591 = vld [vmem:[%s6 + $0x68] sm:$0xff]
    %v592 = vld [vmem:[%s6 + $0x70] sm:$0xff]
    %v593 = vld [vmem:[%s6 + $0x78] sm:$0xff]
    %594 = vmatpush.msra.mxu0 %v593
    %595 = vmatpush.msra.mxu0 %v592
    %596 = vmatpush.msra.mxu0 %v591
    %597 = vmatpush.msra.mxu0 %v590
    %598 = vmatpush.msra.mxu0 %v589
    %599 = vmatpush.msra.mxu0 %v588
    %600 = vmatpush.msra.mxu0 %v587
    %601 = vmatpush.msra.mxu0 %v586
    %602 = vmatpush.msra.mxu0 %v585
    %603 = vmatpush.msra.mxu0 %v584
    %604 = vmatpush.msra.mxu0 %v583
    %605 = vmatpush.msra.mxu0 %v582
    %606 = vmatpush.msra.mxu0 %v581
    %607 = vmatpush.msra.mxu0 %v580
    %608 = vmatpush.msra.mxu0 %v579
    %609 = vmatpush.msra.mxu0 %v578
    %610 = vmatmul.f32.gmra.mxu0 %v572
    %v611 = vpop.f32.mrf.mxu0
    %v612 = vadd.f32 0.0, %v611
    %613 = vdwg.mxu0
    %v615 = vperm.slane %v577, 0
    %v617 = vadd.f32 %v615, %v612
    %s618 = scalar_lea.vmem %s6, 128
    %v619 = vld [vmem:[%s618] sm:$0xff]
    %v620 = vld [vmem:[%s618 + $0x8] sm:$0xff]
    %v621 = vld [vmem:[%s618 + $0x10] sm:$0xff]
    %v622 = vld [vmem:[%s618 + $0x18] sm:$0xff]
    %v623 = vld [vmem:[%s618 + $0x20] sm:$0xff]
    %v624 = vld [vmem:[%s618 + $0x28] sm:$0xff]
    %v625 = vld [vmem:[%s618 + $0x30] sm:$0xff]
    %v626 = vld [vmem:[%s618 + $0x38] sm:$0xff]
    %v627 = vld [vmem:[%s618 + $0x40] sm:$0xff]
    %v628 = vld [vmem:[%s618 + $0x48] sm:$0xff]
    %v629 = vld [vmem:[%s618 + $0x50] sm:$0xff]
    %v630 = vld [vmem:[%s618 + $0x58] sm:$0xff]
    %v631 = vld [vmem:[%s618 + $0x60] sm:$0xff]
    %v632 = vld [vmem:[%s618 + $0x68] sm:$0xff]
    %v633 = vld [vmem:[%s618 + $0x70] sm:$0xff]
    %v634 = vld [vmem:[%s618 + $0x78] sm:$0xff]
    %635 = vmatpush.msra.mxu0 %v634
    %636 = vmatpush.msra.mxu0 %v633
    %637 = vmatpush.msra.mxu0 %v632
    %638 = vmatpush.msra.mxu0 %v631
    %639 = vmatpush.msra.mxu0 %v630
    %640 = vmatpush.msra.mxu0 %v629
    %641 = vmatpush.msra.mxu0 %v628
    %642 = vmatpush.msra.mxu0 %v627
    %643 = vmatpush.msra.mxu0 %v626
    %644 = vmatpush.msra.mxu0 %v625
    %645 = vmatpush.msra.mxu0 %v624
    %646 = vmatpush.msra.mxu0 %v623
    %647 = vmatpush.msra.mxu0 %v622
    %648 = vmatpush.msra.mxu0 %v621
    %649 = vmatpush.msra.mxu0 %v620
    %650 = vmatpush.msra.mxu0 %v619
    %651 = vmatmul.f32.gmra.mxu0 %v573
    %v652 = vpop.f32.mrf.mxu0
    %v653 = vadd.f32 0.0, %v652
    %654 = vdwg.mxu0
    %v655 = vadd.f32 %v617, %v653
    %s656 = scalar_lea.vmem %s6, 256
    %v657 = vld [vmem:[%s656] sm:$0xff]
    %v658 = vld [vmem:[%s656 + $0x8] sm:$0xff]
    %v659 = vld [vmem:[%s656 + $0x10] sm:$0xff]
    %v660 = vld [vmem:[%s656 + $0x18] sm:$0xff]
    %v661 = vld [vmem:[%s656 + $0x20] sm:$0xff]
    %v662 = vld [vmem:[%s656 + $0x28] sm:$0xff]
    %v663 = vld [vmem:[%s656 + $0x30] sm:$0xff]
    %v664 = vld [vmem:[%s656 + $0x38] sm:$0xff]
    %v665 = vld [vmem:[%s656 + $0x40] sm:$0xff]
    %v666 = vld [vmem:[%s656 + $0x48] sm:$0xff]
    %v667 = vld [vmem:[%s656 + $0x50] sm:$0xff]
    %v668 = vld [vmem:[%s656 + $0x58] sm:$0xff]
    %v669 = vld [vmem:[%s656 + $0x60] sm:$0xff]
    %v670 = vld [vmem:[%s656 + $0x68] sm:$0xff]
    %v671 = vld [vmem:[%s656 + $0x70] sm:$0xff]
    %v672 = vld [vmem:[%s656 + $0x78] sm:$0xff]
    %673 = vmatpush.msra.mxu0 %v672
    %674 = vmatpush.msra.mxu0 %v671
    %675 = vmatpush.msra.mxu0 %v670
    %676 = vmatpush.msra.mxu0 %v669
    %677 = vmatpush.msra.mxu0 %v668
    %678 = vmatpush.msra.mxu0 %v667
    %679 = vmatpush.msra.mxu0 %v666
    %680 = vmatpush.msra.mxu0 %v665
    %681 = vmatpush.msra.mxu0 %v664
    %682 = vmatpush.msra.mxu0 %v663
    %683 = vmatpush.msra.mxu0 %v662
    %684 = vmatpush.msra.mxu0 %v661
    %685 = vmatpush.msra.mxu0 %v660
    %686 = vmatpush.msra.mxu0 %v659
    %687 = vmatpush.msra.mxu0 %v658
    %688 = vmatpush.msra.mxu0 %v657
    %689 = vmatmul.f32.gmra.mxu0 %v574
    %v690 = vpop.f32.mrf.mxu0
    %v691 = vadd.f32 0.0, %v690
    %692 = vdwg.mxu0
    %v693 = vadd.f32 %v655, %v691
    %s694 = scalar_lea.vmem %s6, 384
    %v695 = vld [vmem:[%s694] sm:$0xff]
    %v696 = vld [vmem:[%s694 + $0x8] sm:$0xff]
    %v697 = vld [vmem:[%s694 + $0x10] sm:$0xff]
    %v698 = vld [vmem:[%s694 + $0x18] sm:$0xff]
    %v699 = vld [vmem:[%s694 + $0x20] sm:$0xff]
    %v700 = vld [vmem:[%s694 + $0x28] sm:$0xff]
    %v701 = vld [vmem:[%s694 + $0x30] sm:$0xff]
    %v702 = vld [vmem:[%s694 + $0x38] sm:$0xff]
    %v703 = vld [vmem:[%s694 + $0x40] sm:$0xff]
    %v704 = vld [vmem:[%s694 + $0x48] sm:$0xff]
    %v705 = vld [vmem:[%s694 + $0x50] sm:$0xff]
    %v706 = vld [vmem:[%s694 + $0x58] sm:$0xff]
    %v707 = vld [vmem:[%s694 + $0x60] sm:$0xff]
    %v708 = vld [vmem:[%s694 + $0x68] sm:$0xff]
    %v709 = vld [vmem:[%s694 + $0x70] sm:$0xff]
    %v710 = vld [vmem:[%s694 + $0x78] sm:$0xff]
    %711 = vmatpush.msra.mxu0 %v710
    %712 = vmatpush.msra.mxu0 %v709
    %713 = vmatpush.msra.mxu0 %v708
    %714 = vmatpush.msra.mxu0 %v707
    %715 = vmatpush.msra.mxu0 %v706
    %716 = vmatpush.msra.mxu0 %v705
    %717 = vmatpush.msra.mxu0 %v704
    %718 = vmatpush.msra.mxu0 %v703
    %719 = vmatpush.msra.mxu0 %v702
    %720 = vmatpush.msra.mxu0 %v701
    %721 = vmatpush.msra.mxu0 %v700
    %722 = vmatpush.msra.mxu0 %v699
    %723 = vmatpush.msra.mxu0 %v698
    %724 = vmatpush.msra.mxu0 %v697
    %725 = vmatpush.msra.mxu0 %v696
    %726 = vmatpush.msra.mxu0 %v695
    %727 = vmatmul.f32.gmra.mxu0 %v575
    %v728 = vpop.f32.mrf.mxu0
    %v729 = vadd.f32 0.0, %v728
    %730 = vdwg.mxu0
    %v731 = vadd.f32 %v693, %v729
    %s732 = scalar_lea.vmem %s6, 512
    %v733 = vld [vmem:[%s732] sm:$0xff]
    %v734 = vld [vmem:[%s732 + $0x8] sm:$0xff]
    %v735 = vld [vmem:[%s732 + $0x10] sm:$0xff]
    %v736 = vld [vmem:[%s732 + $0x18] sm:$0xff]
    %v737 = vld [vmem:[%s732 + $0x20] sm:$0xff]
    %v738 = vld [vmem:[%s732 + $0x28] sm:$0xff]
    %v739 = vld [vmem:[%s732 + $0x30] sm:$0xff]
    %v740 = vld [vmem:[%s732 + $0x38] sm:$0xff]
    %v741 = vld [vmem:[%s732 + $0x40] sm:$0xff]
    %v742 = vld [vmem:[%s732 + $0x48] sm:$0xff]
    %v743 = vld [vmem:[%s732 + $0x50] sm:$0xff]
    %v744 = vld [vmem:[%s732 + $0x58] sm:$0xff]
    %v745 = vld [vmem:[%s732 + $0x60] sm:$0xff]
    %v746 = vld [vmem:[%s732 + $0x68] sm:$0xff]
    %v747 = vld [vmem:[%s732 + $0x70] sm:$0xff]
    %v748 = vld [vmem:[%s732 + $0x78] sm:$0xff]
    %749 = vmatpush.msra.mxu0 %v748
    %750 = vmatpush.msra.mxu0 %v747
    %751 = vmatpush.msra.mxu0 %v746
    %752 = vmatpush.msra.mxu0 %v745
    %753 = vmatpush.msra.mxu0 %v744
    %754 = vmatpush.msra.mxu0 %v743
    %755 = vmatpush.msra.mxu0 %v742
    %756 = vmatpush.msra.mxu0 %v741
    %757 = vmatpush.msra.mxu0 %v740
    %758 = vmatpush.msra.mxu0 %v739
    %759 = vmatpush.msra.mxu0 %v738
    %760 = vmatpush.msra.mxu0 %v737
    %761 = vmatpush.msra.mxu0 %v736
    %762 = vmatpush.msra.mxu0 %v735
    %763 = vmatpush.msra.mxu0 %v734
    %764 = vmatpush.msra.mxu0 %v733
    %765 = vmatmul.f32.gmra.mxu0 %v576
    %v766 = vpop.f32.mrf.mxu0
    %v767 = vadd.f32 0.0, %v766
    %768 = vdwg.mxu0
    %v769 = vadd.f32 %v731, %v767
    %v770 = vmul.f32 %v769, %v77
    %v771 = vadd.f32 %v770, %v58
    %vm772 = vcmask 130048
    %773 = vst.msk [vmem:[#allocation5] sm:$0xff] %vm772, %v771
    // Predicated region
    $region38: #{forward.1} parent=1 // pred_check
      _
    $region39: #{forward.1} parent=1 // pred_check_branch
      %775 = sbr.rel (0) target = $region41
    $region40: #{forward.1} parent=1 // pred_region
      %777 = vsyncadd [#allocation4], 0
      %s779 = sshll.u32 [#allocation5], 4
      %s780 = int_to_ptr.vmem [resolvable:$true] %s779
      %s781 = sshll.u32 %s8, 4
      %s782 = int_to_ptr.hbm [resolvable:$true] %s781
      %784 = dma.vmem_to_hbm [thread:$0]  %s780, 128, %s782, [#allocation4]
    $region41: #{forward.1} parent=1 // pred_fallthru
      _
    // Predicated region
    $region42: #{forward.1} parent=1 // pred_check
      _
    $region43: #{forward.1} parent=1 // pred_check_branch
      %786 = sbr.rel (0) target = $region45
    $region44: #{forward.1} parent=1 // pred_region
      %788 = dma.done [#allocation4], 128
    $region45: #{forward.1} parent=1 // pred_fallthru
      _
    %789 = vsyncpa [#allocation3], 1
    %790 = vsyncpa [#allocation4], 1

</llo_original>
